<compile_context>
chip_gen: v5e
topology: v5e:2x2
jax: 0.10.0
libtpu: 0.0.40
codegen_flags: <defaults>
</compile_context>

<pallas_src>
import jax
import jax.numpy as jnp
from jax.experimental import pallas as pl
from jax.experimental.pallas import tpu as pltpu


def _round_up(n, m):
    return (n + m - 1) // m * m


def _largest_tile(total_128, cap):
    """Largest multiple-of-128 divisor of `total_128` (a multiple of 128)
    that is <= cap (cap >= 128), so the reduction dim is never over-padded."""
    n = total_128 // 128
    best = 1
    for d in range(1, n + 1):
        if n % d == 0 and d * 128 <= cap:
            best = d
    return best * 128


def _head_kernel(x_ref, w1_ref, b1_ref, w2_ref, b2_ref, o_ref, acc_ref):
    # Grid: (B tiles [parallel], 4H tiles [arbitrary, reduction last]).
    k = pl.program_id(1)

    @pl.when(k == 0)
    def _():
        # Seed the accumulator with the out_proj bias (saves the epilogue add).
        acc_ref[...] = jnp.broadcast_to(
            b2_ref[...].astype(jnp.float32), acc_ref.shape)

    # dense tile: [bm, H] @ [H, tk] -> [bm, tk]   (MXU, f32 accumulate)
    h = jnp.dot(x_ref[...], w1_ref[...], preferred_element_type=jnp.float32)
    h = h + b1_ref[...].astype(jnp.float32)

    # exact (erf) GELU -- matches transformers get_activation('gelu') / torch
    h = 0.5 * h * (1.0 + jax.lax.erf(h * 0.7071067811865476))

    # out_proj tile: [bm, tk] @ [tk, L] -> accumulate into [bm, L]
    acc_ref[...] += jnp.dot(h.astype(w2_ref.dtype), w2_ref[...],
                            preferred_element_type=jnp.float32)

    @pl.when(k == pl.num_programs(1) - 1)
    def _():
        o_ref[...] = acc_ref[...].astype(o_ref.dtype)


def prepare_koelectra_head_params(w1, b1, w2, b2, *, weights_dtype=None):
    """One-time (model-init) weight preparation: optional cast + 4H padding.

    w1: [H, 4H], b1: [4H], w2: [4H, L], b2: [L].
    """
    H, H4 = w1.shape
    L = w2.shape[1]

    if weights_dtype is not None:
        w1 = w1.astype(weights_dtype)
        b1 = b1.astype(weights_dtype)
        w2 = w2.astype(weights_dtype)
        b2 = b2.astype(weights_dtype)

    w_bytes = jnp.dtype(w1.dtype).itemsize
    H4_128 = _round_up(H4, 128)
    # tk: biggest divisor of round_up(4H, 128) whose double-buffered
    # [H, tk] W1 tile stays within ~16 MiB (v7x-safe), capped at 1536.
    cap = max(128, min(1536, (16 * 1024 * 1024) // (2 * H * w_bytes)))
    tk = _largest_tile(H4_128, cap)
    H4_pad = H4_128  # tk divides H4_128 by construction -> no over-padding.

    pad4h = H4_pad - H4  # zero whenever 4H % 128 == 0 -> pads are elided.
    w1_p = jnp.pad(w1, ((0, 0), (0, pad4h))) if pad4h else w1
    b1_p = (jnp.pad(b1, (0, pad4h)) if pad4h else b1).reshape(1, H4_pad)
    w2_p = jnp.pad(w2, ((0, pad4h), (0, 0))) if pad4h else w2
    b2_p = b2.reshape(1, L)

    return dict(w1=w1_p, b1=b1_p, w2=w2_p, b2=b2_p,
                H=H, H4=H4, H4_pad=H4_pad, L=L, tk=tk)


def koelectra_classification_head(features, params):
    """features: [B, S, H] -> logits [B, num_labels]."""
    B, S, H = features.shape
    assert H == params["H"]
    H4_pad, L, tk = params["H4_pad"], params["L"], params["tk"]
    w1_p, b1_p = params["w1"], params["b1"]
    w2_p, b2_p = params["w2"], params["b2"]
    out_dtype = features.dtype

    # CLS slice (dropout identity in eval).  Cast x to the weight dtype so a
    # bf16-weight config runs a homogeneous bf16 MXU matmul (f32 accumulate
    # stays inside the kernel).
    x = features[:, 0, :].astype(w1_p.dtype)

    x_bytes = jnp.dtype(x.dtype).itemsize
    min_sub = max(8, 32 // x_bytes)                        # 8 f32 / 16 bf16
    B_pad = _round_up(B, min_sub)
    # One B tile -> weights streamed from HBM exactly once; only split for
    # very large batches (then the "parallel" axis megacore-shards on v7x).
    bm_cap = max(min_sub,
                 min(1024,
                     ((8 * 1024 * 1024) // (2 * H * x_bytes))
                     // min_sub * min_sub))
    bm = min(B_pad, bm_cap)
    B_pad = _round_up(B_pad, bm)
    x_p = jnp.pad(x, ((0, B_pad - B), (0, 0))) if B_pad != B else x

    grid = (B_pad // bm, H4_pad // tk)

    out_bytes = jnp.dtype(out_dtype).itemsize
    cost = pl.CostEstimate(
        flops=2 * B_pad * H * H4_pad + 2 * B_pad * H4_pad * L,
        transcendentals=B_pad * H4_pad,
        bytes_accessed=(x_p.size * x_bytes
                        + sum(int(a.size) * a.dtype.itemsize
                              for a in (w1_p, b1_p, w2_p, b2_p))
                        + B_pad * L * out_bytes),
    )

    out = pl.pallas_call(
        _head_kernel,
        out_shape=jax.ShapeDtypeStruct((B_pad, L), out_dtype),
        grid=grid,
        in_specs=[
            pl.BlockSpec((bm, H), lambda i, k: (i, 0)),      # x
            pl.BlockSpec((H, tk), lambda i, k: (0, k)),      # W1 tile
            pl.BlockSpec((1, tk), lambda i, k: (0, k)),      # b1 tile
            pl.BlockSpec((tk, L), lambda i, k: (k, 0)),      # W2 tile (L full)
            pl.BlockSpec((1, L), lambda i, k: (0, 0)),       # b2
        ],
        out_specs=pl.BlockSpec((bm, L), lambda i, k: (i, 0)),
        scratch_shapes=[pltpu.VMEM((bm, L), jnp.float32)],
        compiler_params=pltpu.CompilerParams(
            dimension_semantics=("parallel", "arbitrary"),
            vmem_limit_bytes=48 * 1024 * 1024,
        ),
        cost_estimate=cost,
    )(x_p, w1_p, b1_p, w2_p, b2_p)

    return out[:B, :]


if __name__ == "__main__":
    # Small config: hidden_size=32 -> intermediate 4*32=128, num_labels=4
    B, S, H = 2, 8, 32
    H4 = 4 * H
    L = 4

    key = jax.random.PRNGKey(0)
    k_feat, k_w1, k_b1, k_w2, k_b2 = jax.random.split(key, 5)

    features = jax.random.normal(k_feat, (B, S, H), dtype=jnp.float32)

    # nn.Linear-shaped synthetic params (dense H->4H, out_proj 4H->L)
    w1 = jax.random.normal(k_w1, (H, H4), dtype=jnp.float32) * 0.02
    b1 = jax.random.normal(k_b1, (H4,), dtype=jnp.float32) * 0.02
    w2 = jax.random.normal(k_w2, (H4, L), dtype=jnp.float32) * 0.02
    b2 = jax.random.normal(k_b2, (L,), dtype=jnp.float32) * 0.02

    # Weight preparation happens once (model init); pass
    # weights_dtype=jnp.bfloat16 here to halve weight HBM traffic in prod.
    params = prepare_koelectra_head_params(w1, b1, w2, b2)

    logits = koelectra_classification_head(features, params)
    jax.block_until_ready(logits)

    # Pure-JAX reference
    x = features[:, 0, :]
    h = jnp.dot(x, w1) + b1
    h = 0.5 * h * (1.0 + jax.lax.erf(h * 0.7071067811865476))
    ref = jnp.dot(h, w2) + b2

    assert logits.shape == (B, L)
    assert jnp.allclose(logits, ref, atol=1e-5, rtol=1e-5)

    print("KERNEL_OK")
</pallas_src>

<mosaic_0001>
module attributes {stable_mosaic.version = 11 : i64} {
  func.func @_head_kernel(%arg0: i32, %arg1: i32, %arg2: memref<8x32xf32, #tpu.memory_space<vmem>>, %arg3: memref<32x128xf32, #tpu.memory_space<vmem>>, %arg4: memref<1x128xf32, #tpu.memory_space<vmem>>, %arg5: memref<128x4xf32, #tpu.memory_space<vmem>>, %arg6: memref<1x4xf32, #tpu.memory_space<vmem>>, %arg7: memref<8x4xf32, #tpu.memory_space<vmem>>, %arg8: memref<8x4xf32, #tpu.memory_space<vmem>>) attributes {dimension_semantics = [#tpu.dimension_semantics<parallel>, #tpu.dimension_semantics<arbitrary>], iteration_bounds = array<i64: 1, 1>, scalar_prefetch = 0 : i64, scratch_operands = 1 : i64, tpu.core_type = #tpu.core_type<tc>, window_params = [{transform_indices = @transform_0, window_bounds = array<i64: 8, 32>}, {transform_indices = @transform_1, window_bounds = array<i64: 32, 128>}, {transform_indices = @transform_2, window_bounds = array<i64: 1, 128>}, {transform_indices = @transform_3, window_bounds = array<i64: 128, 4>}, {pipeline_mode = #tpu.pipeline_mode<synchronous>, transform_indices = @transform_4, window_bounds = array<i64: 1, 4>}, {transform_indices = @transform_5, window_bounds = array<i64: 8, 4>}]} {
    %c0_i32 = arith.constant 0 : i32
    %0 = arith.cmpi eq, %arg1, %c0_i32 : i32
    %1 = arith.extui %0 : i1 to i32
    %c0_i32_0 = arith.constant 0 : i32
    %2 = arith.cmpi ne, %1, %c0_i32_0 : i32
    scf.if %2 {
      %c0_18 = arith.constant 0 : index
      %c0_19 = arith.constant 0 : index
      %25 = vector.load %arg6[%c0_18, %c0_19] : memref<1x4xf32, #tpu.memory_space<vmem>>, vector<1x4xf32>
      %26 = vector.shape_cast %25 : vector<1x4xf32> to vector<1x4xf32>
      %27 = vector.broadcast %26 : vector<1x4xf32> to vector<8x4xf32>
      %c0_20 = arith.constant 0 : index
      %c0_21 = arith.constant 0 : index
      %28 = vector.load %arg8[%c0_20, %c0_21] : memref<8x4xf32, #tpu.memory_space<vmem>>, vector<8x4xf32>
      tpu.vector_store %arg8[%c0_20, %c0_21], %27 {strides = array<i32>} : memref<8x4xf32, #tpu.memory_space<vmem>>, vector<8x4xf32>,
    } else {
    }
    %c0 = arith.constant 0 : index
    %c0_1 = arith.constant 0 : index
    %3 = vector.load %arg2[%c0, %c0_1] : memref<8x32xf32, #tpu.memory_space<vmem>>, vector<8x32xf32>
    %c0_2 = arith.constant 0 : index
    %c0_3 = arith.constant 0 : index
    %4 = vector.load %arg3[%c0_2, %c0_3] : memref<32x128xf32, #tpu.memory_space<vmem>>, vector<32x128xf32>
    %cst = arith.constant dense<0.000000e+00> : vector<8x128xf32>
    %5 = tpu.matmul %3, %4, %cst {dimension_numbers = #tpu.dot_dimension_numbers<[1], [0], [0], [1], [0, 0, 1, 1], [], []>} : vector<8x32xf32>, vector<32x128xf32>, vector<8x128xf32> -> vector<8x128xf32>
    %c0_4 = arith.constant 0 : index
    %c0_5 = arith.constant 0 : index
    %6 = vector.load %arg4[%c0_4, %c0_5] : memref<1x128xf32, #tpu.memory_space<vmem>>, vector<1x128xf32>
    %7 = vector.broadcast %6 : vector<1x128xf32> to vector<8x128xf32>
    %8 = arith.addf %5, %7 : vector<8x128xf32>
    %cst_6 = arith.constant 5.000000e-01 : f32
    %9 = vector.broadcast %cst_6 : f32 to vector<8x128xf32>
    %10 = arith.mulf %9, %8 : vector<8x128xf32>
    %cst_7 = arith.constant 0.707106769 : f32
    %11 = vector.broadcast %cst_7 : f32 to vector<8x128xf32>
    %12 = arith.mulf %8, %11 : vector<8x128xf32>
    %13 = math.erf %12 : vector<8x128xf32>
    %cst_8 = arith.constant 1.000000e+00 : f32
    %14 = vector.broadcast %cst_8 : f32 to vector<8x128xf32>
    %15 = arith.addf %14, %13 : vector<8x128xf32>
    %16 = arith.mulf %10, %15 : vector<8x128xf32>
    %c0_9 = arith.constant 0 : index
    %c0_10 = arith.constant 0 : index
    %17 = vector.load %arg8[%c0_9, %c0_10] : memref<8x4xf32, #tpu.memory_space<vmem>>, vector<8x4xf32>
    %c0_11 = arith.constant 0 : index
    %c0_12 = arith.constant 0 : index
    %18 = vector.load %arg5[%c0_11, %c0_12] : memref<128x4xf32, #tpu.memory_space<vmem>>, vector<128x4xf32>
    %cst_13 = arith.constant dense<0.000000e+00> : vector<8x4xf32>
    %19 = tpu.matmul %16, %18, %cst_13 {dimension_numbers = #tpu.dot_dimension_numbers<[1], [0], [0], [1], [0, 0, 1, 1], [], []>} : vector<8x128xf32>, vector<128x4xf32>, vector<8x4xf32> -> vector<8x4xf32>
    %20 = arith.addf %17, %19 : vector<8x4xf32>
    %c0_14 = arith.constant 0 : index
    %c0_15 = arith.constant 0 : index
    %21 = vector.load %arg8[%c0_14, %c0_15] : memref<8x4xf32, #tpu.memory_space<vmem>>, vector<8x4xf32>
    tpu.vector_store %arg8[%c0_14, %c0_15], %20 {strides = array<i32>} : memref<8x4xf32, #tpu.memory_space<vmem>>, vector<8x4xf32>,
    %c0_i32_16 = arith.constant 0 : i32
    %22 = arith.cmpi eq, %arg1, %c0_i32_16 : i32
    %23 = arith.extui %22 : i1 to i32
    %c0_i32_17 = arith.constant 0 : i32
    %24 = arith.cmpi ne, %23, %c0_i32_17 : i32
    scf.if %24 {
      %c0_18 = arith.constant 0 : index
      %c0_19 = arith.constant 0 : index
      %25 = vector.load %arg8[%c0_18, %c0_19] : memref<8x4xf32, #tpu.memory_space<vmem>>, vector<8x4xf32>
      %c0_20 = arith.constant 0 : index
      %c0_21 = arith.constant 0 : index
      %26 = vector.load %arg7[%c0_20, %c0_21] : memref<8x4xf32, #tpu.memory_space<vmem>>, vector<8x4xf32>
      tpu.vector_store %arg7[%c0_20, %c0_21], %25 {strides = array<i32>} : memref<8x4xf32, #tpu.memory_space<vmem>>, vector<8x4xf32>,
    } else {
    }
    return
  }
  func.func @transform_0(%arg0: i32, %arg1: i32) -> (i32, i32) {
    %c0_i32 = arith.constant 0 : i32
    %c0_i32_0 = arith.constant 0 : i32
    return %arg0, %c0_i32 : i32, i32
  }
  func.func @transform_1(%arg0: i32, %arg1: i32) -> (i32, i32) {
    %c0_i32 = arith.constant 0 : i32
    %c0_i32_0 = arith.constant 0 : i32
    return %c0_i32, %arg1 : i32, i32
  }
  func.func @transform_2(%arg0: i32, %arg1: i32) -> (i32, i32) {
    %c0_i32 = arith.constant 0 : i32
    %c0_i32_0 = arith.constant 0 : i32
    return %c0_i32, %arg1 : i32, i32
  }
  func.func @transform_3(%arg0: i32, %arg1: i32) -> (i32, i32) {
    %c0_i32 = arith.constant 0 : i32
    %c0_i32_0 = arith.constant 0 : i32
    return %arg1, %c0_i32 : i32, i32
  }
  func.func @transform_4(%arg0: i32, %arg1: i32) -> (i32, i32) {
    %c0_i32 = arith.constant 0 : i32
    %c0_i32_0 = arith.constant 0 : i32
    %c0_i32_1 = arith.constant 0 : i32
    return %c0_i32, %c0_i32_0 : i32, i32
  }
  func.func @transform_5(%arg0: i32, %arg1: i32) -> (i32, i32) {
    %c0_i32 = arith.constant 0 : i32
    %c0_i32_0 = arith.constant 0 : i32
    return %arg0, %c0_i32 : i32, i32
  }
}

</mosaic_0001>

<llo_original>
// kernel: tpu_custom_call.1
$region0: #{tpu_custom_call.1}
  #allocation0 [shape = 'u32[]', space=smem, size = 0x4, offset = 0x4, fixed_abs, tag = 'smem constant byte address 0x4 - core index']
  #allocation1 [shape = 'u32[72,128]{1,0:T(1,128)}', space=vmem, size = 0x9000, scoped, tag = 'internal scratch']
  #allocation2 [shape = 'f32[8,4]{1,0:T(8,128)}', space=vmem, size = 0x1000, scoped, tag = 'scratch operand']
  %s0 = inlined_call_operand.vmem [shape: f32[8,32], index: 0, kind: input, shape index: {}]
  %s1 = inlined_call_operand.vmem [shape: f32[32,128], index: 1, kind: input, shape index: {}]
  %s2 = inlined_call_operand.vmem [shape: f32[1,128], index: 2, kind: input, shape index: {}]
  %s3 = inlined_call_operand.vmem [shape: f32[128,4], index: 3, kind: input, shape index: {}]
  %s4 = inlined_call_operand.vmem [shape: f32[1,4], index: 4, kind: input, shape index: {}]
  %s5 = inlined_call_operand.vmem [shape: f32[8,4], index: 5, kind: output, shape index: {}]
  %s6 = sld [smem:[#allocation0]]
  $region38: #{tpu_custom_call.1} parent=0
    _
  %s8 = ssub.s32 1, %s6
  %s9 = scalar_select 0, %s8, %s6
  // Predicated region
  $region2: #{tpu_custom_call.1} parent=0 // pred_check
    _
  $region3: #{tpu_custom_call.1} parent=0 // pred_check_branch
    %11 = sbr.rel (0) target = $region5
  $region4: #{tpu_custom_call.1} parent=0 // pred_region
    _
  $region5: #{tpu_custom_call.1} parent=0 // pred_fallthru
    _
  // Predicated region
  $region6: #{tpu_custom_call.1} parent=0 // pred_check
    _
  $region7: #{tpu_custom_call.1} parent=0 // pred_check_branch
    %13 = sbr.rel (0) target = $region9
  $region8: #{tpu_custom_call.1} parent=0 // pred_region
    _
  $region9: #{tpu_custom_call.1} parent=0 // pred_fallthru
    _
  // Predicated region
  $region10: #{tpu_custom_call.1} parent=0 // pred_check
    _
  $region11: #{tpu_custom_call.1} parent=0 // pred_check_branch
    %15 = sbr.rel (0) target = $region13
  $region12: #{tpu_custom_call.1} parent=0 // pred_region
    _
  $region13: #{tpu_custom_call.1} parent=0 // pred_fallthru
    _
  // Predicated region
  $region14: #{tpu_custom_call.1} parent=0 // pred_check
    _
  $region15: #{tpu_custom_call.1} parent=0 // pred_check_branch
    %17 = sbr.rel (0) target = $region17
  $region16: #{tpu_custom_call.1} parent=0 // pred_region
    _
  $region17: #{tpu_custom_call.1} parent=0 // pred_fallthru
    _
  // Predicated region
  $region18: #{tpu_custom_call.1} parent=0 // pred_check
    _
  $region19: #{tpu_custom_call.1} parent=0 // pred_check_branch
    %19 = sbr.rel (0) target = $region21
  $region20: #{tpu_custom_call.1} parent=0 // pred_region
    _
  $region21: #{tpu_custom_call.1} parent=0 // pred_fallthru
    _
  %p20 = scmp.eq.s32.totalorder 0, 0
  // Predicated region
  $region22: #{tpu_custom_call.1} parent=0 // pred_check
    %p21 = pneg %p20
  $region23: #{tpu_custom_call.1} parent=0 // pred_check_branch
    %23 = sbr.rel (%p21) target = $region25
  $region24: #{tpu_custom_call.1} parent=0 // pred_region
    %v24 = vld [vmem:[%s4] sm:$0x1]
    %v26 = vperm.slane %v24, 0
    %vm28 = vcmask 31744
    %29 = vst.msk [vmem:[#allocation2] sm:$0xff] %vm28, %v26
  $region25: #{tpu_custom_call.1} parent=0 // pred_fallthru
    _
  %v30 = vld [vmem:[%s0] sm:$0xff]
  %v31 = vld [vmem:[%s1] sm:$0xff]
  %v32 = vld [vmem:[%s1 + $0x8] sm:$0xff]
  %v33 = vld [vmem:[%s1 + $0x10] sm:$0xff]
  %v34 = vld [vmem:[%s1 + $0x18] sm:$0xff]
  %v35 = vld [vmem:[%s2] sm:$0x1]
  %v37 = vperm.slane %v35, 0
  %vm39 = vcmask 261120
  %v41 = vsel %vm39, %v30, 0
  %43 = vmatpush.msra.mxu0 0.0
  %44 = vmatpush.msra.mxu0 0.0
  %45 = vmatpush.msra.mxu0 0.0
  %46 = vmatpush.msra.mxu0 0.0
  %47 = vmatpush.msra.mxu0 0.0
  %48 = vmatpush.msra.mxu0 0.0
  %49 = vmatpush.msra.mxu0 0.0
  %50 = vmatpush.msra.mxu0 0.0
  %51 = vmatpush.msra.mxu0 0.0
  %52 = vmatpush.msra.mxu0 0.0
  %53 = vmatpush.msra.mxu0 0.0
  %54 = vmatpush.msra.mxu0 0.0
  %55 = vmatpush.msra.mxu0 %v34
  %56 = vmatpush.msra.mxu0 %v33
  %57 = vmatpush.msra.mxu0 %v32
  %58 = vmatpush.msra.mxu0 %v31
  %59 = vmatmul.f32.gmra.mxu0 %v41
  %v60 = vpop.f32.mrf.mxu0
  %v61 = vadd.f32 %v37, %v60
  %62 = vdwg.mxu0
  %v63 = vmul.f32 %v61, 0.5
  %v64 = vmul.f32 %v61, 0.70710677
  %v65 = vmul.f32 %v64, %v64
  %v66 = vmin.f32 16.0, %v65
  %v67 = vmul.f32 %v66, 2.1237322e-06
  %v68 = vadd.f32 %v67, 0.00028619796
  %v69 = vmul.f32 %v66, %v68
  %v70 = vadd.f32 %v69, 0.0036580483
  %v71 = vmul.f32 %v66, %v70
  %v72 = vadd.f32 %v71, 0.05243302
  %v73 = vmul.f32 %v66, %v72
  %v74 = vadd.f32 %v73, 0.18741608
  %v75 = vmul.f32 %v66, %v74
  %v76 = vadd.f32 %v75, 1.1283791
  %v77 = vmul.f32 %v64, %v76
  %v78 = vmul.f32 %v66, 3.8918573e-05
  %v79 = vadd.f32 %v78, 0.001143296
  %v80 = vmul.f32 %v66, %v79
  %v81 = vadd.f32 %v80, 0.014752088
  %v82 = vmul.f32 %v66, %v81
  %v83 = vadd.f32 %v82, 0.112945676
  %v84 = vmul.f32 %v66, %v83
  %v85 = vadd.f32 %v84, 0.4994258
  %v86 = vmul.f32 %v66, %v85
  %v87 = vadd.f32 %v86, 1.0
  %v88 = vrcp.pop %v87
  %v89 = vmul.f32 %v87, %v88
  %v90 = vsub.f32 1.0, %v89
  %v91 = vmul.f32 %v88, %v90
  %v92 = vadd.f32 %v88, %v91
  %vm93 = vweird.f32 %v87
  %vm94 = vweird.f32 %v88
  %vm95 = vmor %vm93, %vm94
  %v96 = vsel %vm95, %v88, %v92
  %v97 = vand.u32 2147483647, %v87
  %vm98 = vcmp.eq.f32.partialorder %v97, 8.507059e+37
  %v99 = vand.u32 %v87, 2147483648
  %v100 = vor.u32 1.1754944e-38, %v99
  %v101 = vsel %vm98, %v100, %v96
  %v102 = vmul.f32 %v77, %v101
  %v103 = vmin.f32 %v102, 1.0
  %v104 = vmax.f32 %v103, -1.0
  %v105 = vadd.f32 %v104, 1.0
  %v106 = vmul.f32 %v63, %v105
  %v107 = vld [vmem:[#allocation2] sm:$0xff]
  %v108 = vld [vmem:[%s3] sm:$0xff]
  %v109 = vld [vmem:[%s3 + $0x8] sm:$0xff]
  %v110 = vld [vmem:[%s3 + $0x10] sm:$0xff]
  %v111 = vld [vmem:[%s3 + $0x18] sm:$0xff]
  %v112 = vld [vmem:[%s3 + $0x20] sm:$0xff]
  %v113 = vld [vmem:[%s3 + $0x28] sm:$0xff]
  %v114 = vld [vmem:[%s3 + $0x30] sm:$0xff]
  %v115 = vld [vmem:[%s3 + $0x38] sm:$0xff]
  %v116 = vld [vmem:[%s3 + $0x40] sm:$0xff]
  %v117 = vld [vmem:[%s3 + $0x48] sm:$0xff]
  %v118 = vld [vmem:[%s3 + $0x50] sm:$0xff]
  %v119 = vld [vmem:[%s3 + $0x58] sm:$0xff]
  %v120 = vld [vmem:[%s3 + $0x60] sm:$0xff]
  %v121 = vld [vmem:[%s3 + $0x68] sm:$0xff]
  %v122 = vld [vmem:[%s3 + $0x70] sm:$0xff]
  %v123 = vld [vmem:[%s3 + $0x78] sm:$0xff]
  %124 = vmatpush.msra.mxu0 %v123
  %125 = vmatpush.msra.mxu0 %v122
  %126 = vmatpush.msra.mxu0 %v121
  %127 = vmatpush.msra.mxu0 %v120
  %128 = vmatpush.msra.mxu0 %v119
  %129 = vmatpush.msra.mxu0 %v118
  %130 = vmatpush.msra.mxu0 %v117
  %131 = vmatpush.msra.mxu0 %v116
  %132 = vmatpush.msra.mxu0 %v115
  %133 = vmatpush.msra.mxu0 %v114
  %134 = vmatpush.msra.mxu0 %v113
  %135 = vmatpush.msra.mxu0 %v112
  %136 = vmatpush.msra.mxu0 %v111
  %137 = vmatpush.msra.mxu0 %v110
  %138 = vmatpush.msra.mxu0 %v109
  %139 = vmatpush.msra.mxu0 %v108
  %140 = vmatmul.f32.gmra.mxu0 %v106
  %v141 = vpop.f32.mrf.mxu0
  %v142 = vadd.f32 0.0, %v141
  %143 = vdwg.mxu0
  %v144 = vadd.f32 %v107, %v142
  %vm145 = vcmask 31744
  %146 = vst.msk [vmem:[#allocation2] sm:$0xff] %vm145, %v144
  // Predicated region
  $region26: #{tpu_custom_call.1} parent=0 // pred_check
    %p147 = pneg %p20
  $region27: #{tpu_custom_call.1} parent=0 // pred_check_branch
    %149 = sbr.rel (%p147) target = $region29
  $region28: #{tpu_custom_call.1} parent=0 // pred_region
    %v150 = vld [vmem:[#allocation2] sm:$0xff]
    %151 = vst.msk [vmem:[%s5] sm:$0xff] %vm145, %v150
  $region29: #{tpu_custom_call.1} parent=0 // pred_fallthru
    _
  // Predicated region
  $region30: #{tpu_custom_call.1} parent=0 // pred_check
    _
  $region31: #{tpu_custom_call.1} parent=0 // pred_check_branch
    %153 = sbr.rel (0) target = $region33
  $region32: #{tpu_custom_call.1} parent=0 // pred_region
    _
  $region33: #{tpu_custom_call.1} parent=0 // pred_fallthru
    _
  // Predicated region
  $region34: #{tpu_custom_call.1} parent=0 // pred_check
    _
  $region35: #{tpu_custom_call.1} parent=0 // pred_check_branch
    %155 = sbr.rel (0) target = $region37
  $region36: #{tpu_custom_call.1} parent=0 // pred_region
    _
  $region37: #{tpu_custom_call.1} parent=0 // pred_fallthru
    _

</llo_original>
